<compile_context>
chip_gen: v7x
topology: tpu7x:2x2x1
jax: 0.10.0
libtpu: 0.0.40
codegen_flags: <defaults>
</compile_context>

<pallas_src>
import functools

import jax
import jax.numpy as jnp
from jax.experimental import pallas as pl
from jax.experimental.pallas import tpu as pltpu

_LANES = 128
_NEG = -1.0e30          # finite "minus infinity" used for class padding
_RB_MAX_BCE = 4096      # BCE slab rows per block (4096*128*4B = 2 MiB logits buffer)
_BYTE_BUDGET = 2 << 20  # ~2 MiB of logits bytes per CE block


def _cdiv(a, b):
    return -(-a // b)


def _round_up(x, m):
    return _cdiv(x, m) * m


@functools.lru_cache(maxsize=None)
def _vmem_limit():
    # phys - 16 MiB headroom, clamped to [32, 96] MiB
    # (v7x: 64 MiB phys -> 48 MiB; v5e/v6e: 128 MiB phys -> 96 MiB).
    try:
        phys = getattr(pltpu.get_tpu_info(), "vmem_capacity_bytes", None)
        if phys:
            return int(min(max(int(phys) - (16 << 20), 32 << 20), 96 << 20))
    except Exception:  # defensive: query can fail off-device
        pass
    return 48 << 20


def _compiler_params(semantics=("parallel",)):
    return pltpu.CompilerParams(dimension_semantics=semantics,
                                vmem_limit_bytes=_vmem_limit())


def _pick_grid(total, align, max_block, min_split):
    """Split `total` units into blocks of <= max_block (multiples of `align`).

    Keeps at least 2 (and an even number of) blocks whenever there is enough
    work, so both v7x TensorCores get fed; v5e/v6e are indifferent.
    Returns (block, n_blocks, padded_total).
    """
    total_a = _round_up(max(total, 1), align)
    nblk = _cdiv(total_a, max_block)
    if nblk == 1 and total_a >= min_split:
        nblk = 2
    if nblk > 1 and nblk % 2:
        nblk += 1
    blk = _round_up(_cdiv(total_a, nblk), align)
    return blk, nblk, blk * nblk


# ----------------------------- BCE kernels ----------------------------------

def _bce_t1_kernel(x_ref, lab_ref, o_ref):
    """Single-task BCEWithLogitsLoss; labels already occupy all 128 lanes."""
    x = x_ref[...].astype(jnp.float32)
    y = jnp.bitwise_and(lab_ref[...], 1).astype(jnp.float32)
    o_ref[...] = jnp.maximum(x, 0.0) - x * y + jnp.log1p(jnp.exp(-jnp.abs(x)))


def _bce_dense_kernel(sel_ref, x_ref, lab_ref, o_ref, *, num_tasks):
    """Lane-dense multi-task BCEWithLogitsLoss.

    sel_ref: (T, G, 128) constant 0/1 selectors (VMEM-resident across the grid)
             sel[t, c, l] = 1  iff  l == c * T_pad + t
    x_ref  : (RB, 128) logits slab; element (r, l) = sample r*G + l//T_pad,
             task l % T_pad
    lab_ref: (RB, G) int32 labels (one per sample)
    o_ref  : (RB, 128) per-element loss, same flat layout as x_ref
    """
    x = x_ref[...].astype(jnp.float32)          # cast in-kernel, hidden under DMA
    lab = lab_ref[...]
    # Exact bit decode + lane expansion as tiny 0/1 matmuls on the otherwise
    # idle MXU (only 0/1 values flow through the MXU -> exact at any precision).
    # TODO(synk): for num_tasks >= 16 fuse the per-bit matmuls into a single
    # (RB,128)@(128,128) matmul to improve MXU cadence.
    y = jnp.zeros(x.shape, jnp.float32)
    for t in range(num_tasks):
        plane = jnp.bitwise_and(jnp.right_shift(lab, t), 1).astype(jnp.float32)
        y = y + jnp.dot(plane, sel_ref[t], preferred_element_type=jnp.float32)
    o_ref[...] = jnp.maximum(x, 0.0) - x * y + jnp.log1p(jnp.exp(-jnp.abs(x)))


def _bce_forward(logits, labels, num_tasks):
    N, T = logits.shape
    t_pad = 1 << (T - 1).bit_length()            # next pow2 >= T (divides 128; T<=32)
    G = _LANES // t_pad                          # samples per 128-lane slab row
    M = _cdiv(N, G)                              # slab rows
    RB, nblk, M_pad = _pick_grid(M, 8, _RB_MAX_BCE, min_split=256)
    N_pad = M_pad * G

    if t_pad != T:                               # pad tasks (sliced off below)
        logits = jnp.pad(logits, ((0, 0), (0, t_pad - T)))
    if N_pad != N:
        logits = jnp.pad(logits, ((0, N_pad - N), (0, 0)))
        labels = jnp.pad(labels, (0, N_pad - N))
    x2 = logits.reshape(M_pad, _LANES)           # free row-major reinterpretation
    lab2 = labels.reshape(M_pad, G)

    if T == 1:
        out = pl.pallas_call(
            _bce_t1_kernel,
            out_shape=jax.ShapeDtypeStruct((M_pad, _LANES), jnp.float32),
            grid_spec=pltpu.PrefetchScalarGridSpec(
                num_scalar_prefetch=0,
                grid=(nblk,),
                in_specs=[pl.BlockSpec((RB, _LANES), lambda i: (i, 0)),
                          pl.BlockSpec((RB, G), lambda i: (i, 0))],
                out_specs=pl.BlockSpec((RB, _LANES), lambda i: (i, 0))),
            compiler_params=_compiler_params(),
        )(x2, lab2)
    else:
        # Hoisted 0/1 bit->lane selectors: built once in the wrapper, stay
        # VMEM-resident across the grid (block index never changes).
        t_i = jnp.arange(T, dtype=jnp.int32)[:, None, None]
        c_i = jnp.arange(G, dtype=jnp.int32)[None, :, None]
        l_i = jnp.arange(_LANES, dtype=jnp.int32)[None, None, :]
        sel = (l_i == c_i * t_pad + t_i).astype(jnp.float32)     # (T, G, 128)
        out = pl.pallas_call(
            functools.partial(_bce_dense_kernel, num_tasks=T),
            out_shape=jax.ShapeDtypeStruct((M_pad, _LANES), jnp.float32),
            grid_spec=pltpu.PrefetchScalarGridSpec(
                num_scalar_prefetch=0,
                grid=(nblk,),
                in_specs=[pl.BlockSpec((T, G, _LANES), lambda i: (0, 0, 0)),
                          pl.BlockSpec((RB, _LANES), lambda i: (i, 0)),
                          pl.BlockSpec((RB, G), lambda i: (i, 0))],
                out_specs=pl.BlockSpec((RB, _LANES), lambda i: (i, 0))),
            compiler_params=_compiler_params(),
        )(sel, x2, lab2)
    return out.reshape(N_pad, t_pad)[:N, :T]


# ----------------------------- CE kernels ------------------------------------

def _ce_small_kernel(x_ref, lab_ref, o_ref):
    """CrossEntropyLoss (reduction='none'), classes on sublanes / samples on lanes.

    x_ref  : (C, TN) transposed logits block
    lab_ref: (1, TN) int32 class ids
    o_ref  : (1, TN) per-sample loss (lane-dense row)
    """
    x = x_ref[...].astype(jnp.float32)
    lab = lab_ref[...]
    cls = jax.lax.broadcasted_iota(jnp.int32, x.shape, 0)
    m = jnp.max(x, axis=0, keepdims=True)                        # (1, TN)
    s = jnp.sum(jnp.exp(x - m), axis=0, keepdims=True)
    picked = jnp.sum(jnp.where(cls == lab, x, 0.0), axis=0, keepdims=True)
    # TODO(synk): PyTorch ignore_index / out-of-range labels are not handled
    # (an unmatched label silently yields picked = 0, i.e. loss = logsumexp).
    o_ref[...] = m + jnp.log(s) - picked


def _ce_small_forward(logits, labels):
    N, C = logits.shape
    tn_max = max(_LANES, min(32768, _BYTE_BUDGET // (4 * C) // _LANES * _LANES))
    TN, nblk, N_pad = _pick_grid(N, _LANES, tn_max, min_split=2 * _LANES)
    # Layout plumbing: classes -> sublanes, samples -> lanes, so every vector op
    # in the kernel runs on full 128-lane vregs and the output row is lane-dense.
    xt = logits.T                                                # (C, N)
    if N_pad != N:
        xt = jnp.pad(xt, ((0, 0), (0, N_pad - N)))
        labels = jnp.pad(labels, (0, N_pad - N))
    out = pl.pallas_call(
        _ce_small_kernel,
        out_shape=jax.ShapeDtypeStruct((1, N_pad), jnp.float32),
        grid_spec=pltpu.PrefetchScalarGridSpec(
            num_scalar_prefetch=0,
            grid=(nblk,),
            in_specs=[pl.BlockSpec((C, TN), lambda i: (0, i)),
                      pl.BlockSpec((1, TN), lambda i: (0, i))],
            out_specs=pl.BlockSpec((1, TN), lambda i: (0, i))),
        compiler_params=_compiler_params(),
    )(xt, labels.reshape(1, N_pad))
    return out.reshape(N_pad)[:N]


def _ce_tiled_kernel(x_ref, lab_ref, o_ref, m_ref, s_ref, p_ref):
    """Class-tiled streaming (online) logsumexp CrossEntropy.

    Grid: (row_blocks, class_blocks), class axis last / 'arbitrary'.
    x_ref  : (tm, tc) logits block        lab_ref: (tm, 1) int32
    o_ref  : (tm, 1) loss (written on the last class step only)
    m/s/p  : running max / sum-of-exp / picked-logit scratch, (tm, 1) f32
    """
    k = pl.program_id(1)

    @pl.when(k == 0)
    def _():
        m_ref[...] = jnp.full_like(m_ref, _NEG)
        s_ref[...] = jnp.zeros_like(s_ref)
        p_ref[...] = jnp.zeros_like(p_ref)

    x = x_ref[...].astype(jnp.float32)
    lab = lab_ref[...]
    tc = x.shape[1]
    col = jax.lax.broadcasted_iota(jnp.int32, x.shape, 1) + k * tc
    m_old = m_ref[...]
    m_new = jnp.maximum(m_old, jnp.max(x, axis=-1, keepdims=True))
    s_ref[...] = (s_ref[...] * jnp.exp(m_old - m_new)
                  + jnp.sum(jnp.exp(x - m_new), axis=-1, keepdims=True))
    m_ref[...] = m_new
    p_ref[...] = p_ref[...] + jnp.sum(jnp.where(col == lab, x, 0.0),
                                      axis=-1, keepdims=True)

    @pl.when(k == pl.num_programs(1) - 1)
    def _():
        # TODO(synk): ignore_index / out-of-range labels not handled (see above).
        o_ref[...] = m_ref[...] + jnp.log(s_ref[...]) - p_ref[...]


def _ce_tiled_forward(logits, labels):
    N, C = logits.shape
    nblk_c = _cdiv(_round_up(C, _LANES), 2048)
    tc = _round_up(_cdiv(C, nblk_c), _LANES)
    c_pad = tc * nblk_c
    tm_max = max(8, min(1024, _BYTE_BUDGET // (4 * tc) // 8 * 8))
    tm, nblk_m, N_pad = _pick_grid(N, 8, tm_max, min_split=64)
    if c_pad != C:
        logits = jnp.pad(logits, ((0, 0), (0, c_pad - C)), constant_values=_NEG)
    if N_pad != N:
        logits = jnp.pad(logits, ((0, N_pad - N), (0, 0)))
        labels = jnp.pad(labels, (0, N_pad - N))
    out = pl.pallas_call(
        _ce_tiled_kernel,
        out_shape=jax.ShapeDtypeStruct((N_pad, 1), jnp.float32),
        grid_spec=pltpu.PrefetchScalarGridSpec(
            num_scalar_prefetch=0,
            grid=(nblk_m, nblk_c),
            in_specs=[pl.BlockSpec((tm, tc), lambda i, k: (i, k)),
                      pl.BlockSpec((tm, 1), lambda i, k: (i, 0))],
            out_specs=pl.BlockSpec((tm, 1), lambda i, k: (i, 0)),
            scratch_shapes=[pltpu.VMEM((tm, 1), jnp.float32),
                            pltpu.VMEM((tm, 1), jnp.float32),
                            pltpu.VMEM((tm, 1), jnp.float32)]),
        compiler_params=_compiler_params(("parallel", "arbitrary")),
    )(logits, labels.reshape(N_pad, 1))
    return out.reshape(N_pad)[:N]


# ------------------------------ dispatcher ------------------------------------

def multi_task_loss(merged_logits, labels, *, num_classes, num_tasks):
    """Forward pass of MultiTaskLossModule (reduction='none')."""
    assert merged_logits.ndim == 2, "loss module expects 2D logit"
    N, D = merged_logits.shape
    labels = labels.astype(jnp.int32)
    if num_classes == num_tasks:
        assert D == num_tasks
        assert 1 <= num_tasks <= 32          # reference reads label bits 0..T-1
        return _bce_forward(merged_logits, labels, num_tasks)
    assert num_tasks == 1, "num_tasks should be 1 for multi-class classification"
    assert D == num_classes
    if num_classes <= 64:
        return _ce_small_forward(merged_logits, labels)
    return _ce_tiled_forward(merged_logits, labels)


# --------------------------- reference (pure JAX) ------------------------------

def _ref_bce(logits, labels, num_tasks):
    t = jnp.arange(num_tasks, dtype=jnp.int32)[None, :]
    y = ((labels.astype(jnp.int32)[:, None] & (1 << t)) > 0).astype(jnp.float32)
    x = logits.astype(jnp.float32)
    return jnp.maximum(x, 0.0) - x * y + jnp.log1p(jnp.exp(-jnp.abs(x)))


def _ref_ce(logits, labels):
    x = logits.astype(jnp.float32)
    lse = jax.scipy.special.logsumexp(x, axis=-1)
    picked = jnp.take_along_axis(x, labels[:, None].astype(jnp.int32), axis=-1)[:, 0]
    return lse - picked


# ------------------------------- main ------------------------------------------

if __name__ == "__main__":
    key = jax.random.PRNGKey(0)
    ks = jax.random.split(key, 8)

    # --- Mode 1: multi-task BCE (num_classes == num_tasks) ---------------------
    N, T = 200, 4
    logits = jax.random.normal(ks[0], (N, T), dtype=jnp.float32)
    labels = jax.random.randint(ks[1], (N,), 0, 1 << T, dtype=jnp.int32)
    fn = jax.jit(functools.partial(multi_task_loss, num_classes=T, num_tasks=T))
    out = jax.block_until_ready(fn(logits, labels))
    assert out.shape == (N, T)
    assert jnp.allclose(out, _ref_bce(logits, labels, T), atol=1e-5, rtol=1e-5)

    # --- Mode 1b: num_tasks that does not divide 128 (task-padding path) -------
    N2, T2 = 50, 3
    logits2 = jax.random.normal(ks[2], (N2, T2), dtype=jnp.float32)
    labels2 = jax.random.randint(ks[3], (N2,), 0, 1 << T2, dtype=jnp.int32)
    fn2 = jax.jit(functools.partial(multi_task_loss, num_classes=T2, num_tasks=T2))
    out2 = jax.block_until_ready(fn2(logits2, labels2))
    assert out2.shape == (N2, T2)
    assert jnp.allclose(out2, _ref_bce(logits2, labels2, T2), atol=1e-5, rtol=1e-5)

    # --- Mode 2: small-C cross entropy (lane-dense sublane-reduction path) -----
    N3, C3 = 200, 8
    logits3 = jax.random.normal(ks[4], (N3, C3), dtype=jnp.float32)
    labels3 = jax.random.randint(ks[5], (N3,), 0, C3, dtype=jnp.int32)
    fn3 = jax.jit(functools.partial(multi_task_loss, num_classes=C3, num_tasks=1))
    out3 = jax.block_until_ready(fn3(logits3, labels3))
    assert out3.shape == (N3,)
    assert jnp.allclose(out3, _ref_ce(logits3, labels3), atol=1e-5, rtol=1e-5)

    # --- Mode 2b: large-C cross entropy (class-tiled streaming logsumexp) ------
    N4, C4 = 48, 2500
    logits4 = jax.random.normal(ks[6], (N4, C4), dtype=jnp.float32)
    labels4 = jax.random.randint(ks[7], (N4,), 0, C4, dtype=jnp.int32)
    fn4 = jax.jit(functools.partial(multi_task_loss, num_classes=C4, num_tasks=1))
    out4 = jax.block_until_ready(fn4(logits4, labels4))
    assert out4.shape == (N4,)
    assert jnp.allclose(out4, _ref_ce(logits4, labels4), atol=1e-4, rtol=1e-5)

    print("KERNEL_OK")
</pallas_src>

<mosaic_0001>
module attributes {stable_mosaic.version = 11 : i64} {
  func.func @_bce_dense_kernel(%arg0: i32, %arg1: memref<4x32x128xf32, #tpu.memory_space<vmem>>, %arg2: memref<8x128xf32, #tpu.memory_space<vmem>>, %arg3: memref<8x32xi32, #tpu.memory_space<vmem>>, %arg4: memref<8x128xf32, #tpu.memory_space<vmem>>) attributes {dimension_semantics = [#tpu.dimension_semantics<parallel>], iteration_bounds = array<i64: 1>, scalar_prefetch = 0 : i64, scratch_operands = 0 : i64, tpu.core_type = #tpu.core_type<tc>, window_params = [{pipeline_mode = #tpu.pipeline_mode<synchronous>, transform_indices = @transform_0, window_bounds = array<i64: 4, 32, 128>}, {transform_indices = @transform_1, window_bounds = array<i64: 8, 128>}, {transform_indices = @transform_2, window_bounds = array<i64: 8, 32>}, {transform_indices = @transform_3, window_bounds = array<i64: 8, 128>}]} {
    %c0 = arith.constant 0 : index
    %c0_0 = arith.constant 0 : index
    %0 = vector.load %arg2[%c0, %c0_0] : memref<8x128xf32, #tpu.memory_space<vmem>>, vector<8x128xf32>
    %c0_1 = arith.constant 0 : index
    %c0_2 = arith.constant 0 : index
    %1 = vector.load %arg3[%c0_1, %c0_2] : memref<8x32xi32, #tpu.memory_space<vmem>>, vector<8x32xi32>
    %cst = arith.constant 0.000000e+00 : f32
    %2 = vector.broadcast %cst : f32 to vector<8x128xf32>
    %c0_i32 = arith.constant 0 : i32
    %3 = vector.broadcast %c0_i32 : i32 to vector<8x32xi32>
    %4 = arith.shrsi %1, %3 : vector<8x32xi32>
    %c1_i32 = arith.constant 1 : i32
    %5 = vector.broadcast %c1_i32 : i32 to vector<8x32xi32>
    %6 = arith.andi %4, %5 : vector<8x32xi32>
    %7 = arith.sitofp %6 : vector<8x32xi32> to vector<8x32xf32>
    %c0_3 = arith.constant 0 : index
    %c0_4 = arith.constant 0 : index
    %c0_5 = arith.constant 0 : index
    %8 = vector.load %arg1[%c0_3, %c0_4, %c0_5] : memref<4x32x128xf32, #tpu.memory_space<vmem>>, vector<1x32x128xf32>
    %9 = vector.shape_cast %8 : vector<1x32x128xf32> to vector<32x128xf32>
    %cst_6 = arith.constant dense<0.000000e+00> : vector<8x128xf32>
    %10 = tpu.matmul %7, %9, %cst_6 {dimension_numbers = #tpu.dot_dimension_numbers<[1], [0], [0], [1], [0, 0, 1, 1], [], []>} : vector<8x32xf32>, vector<32x128xf32>, vector<8x128xf32> -> vector<8x128xf32>
    %11 = arith.addf %2, %10 : vector<8x128xf32>
    %c1_i32_7 = arith.constant 1 : i32
    %12 = vector.broadcast %c1_i32_7 : i32 to vector<8x32xi32>
    %13 = arith.shrsi %1, %12 : vector<8x32xi32>
    %c1_i32_8 = arith.constant 1 : i32
    %14 = vector.broadcast %c1_i32_8 : i32 to vector<8x32xi32>
    %15 = arith.andi %13, %14 : vector<8x32xi32>
    %16 = arith.sitofp %15 : vector<8x32xi32> to vector<8x32xf32>
    %c1 = arith.constant 1 : index
    %c0_9 = arith.constant 0 : index
    %c0_10 = arith.constant 0 : index
    %17 = vector.load %arg1[%c1, %c0_9, %c0_10] : memref<4x32x128xf32, #tpu.memory_space<vmem>>, vector<1x32x128xf32>
    %18 = vector.shape_cast %17 : vector<1x32x128xf32> to vector<32x128xf32>
    %cst_11 = arith.constant dense<0.000000e+00> : vector<8x128xf32>
    %19 = tpu.matmul %16, %18, %cst_11 {dimension_numbers = #tpu.dot_dimension_numbers<[1], [0], [0], [1], [0, 0, 1, 1], [], []>} : vector<8x32xf32>, vector<32x128xf32>, vector<8x128xf32> -> vector<8x128xf32>
    %20 = arith.addf %11, %19 : vector<8x128xf32>
    %c2_i32 = arith.constant 2 : i32
    %21 = vector.broadcast %c2_i32 : i32 to vector<8x32xi32>
    %22 = arith.shrsi %1, %21 : vector<8x32xi32>
    %c1_i32_12 = arith.constant 1 : i32
    %23 = vector.broadcast %c1_i32_12 : i32 to vector<8x32xi32>
    %24 = arith.andi %22, %23 : vector<8x32xi32>
    %25 = arith.sitofp %24 : vector<8x32xi32> to vector<8x32xf32>
    %c2 = arith.constant 2 : index
    %c0_13 = arith.constant 0 : index
    %c0_14 = arith.constant 0 : index
    %26 = vector.load %arg1[%c2, %c0_13, %c0_14] : memref<4x32x128xf32, #tpu.memory_space<vmem>>, vector<1x32x128xf32>
    %27 = vector.shape_cast %26 : vector<1x32x128xf32> to vector<32x128xf32>
    %cst_15 = arith.constant dense<0.000000e+00> : vector<8x128xf32>
    %28 = tpu.matmul %25, %27, %cst_15 {dimension_numbers = #tpu.dot_dimension_numbers<[1], [0], [0], [1], [0, 0, 1, 1], [], []>} : vector<8x32xf32>, vector<32x128xf32>, vector<8x128xf32> -> vector<8x128xf32>
    %29 = arith.addf %20, %28 : vector<8x128xf32>
    %c3_i32 = arith.constant 3 : i32
    %30 = vector.broadcast %c3_i32 : i32 to vector<8x32xi32>
    %31 = arith.shrsi %1, %30 : vector<8x32xi32>
    %c1_i32_16 = arith.constant 1 : i32
    %32 = vector.broadcast %c1_i32_16 : i32 to vector<8x32xi32>
    %33 = arith.andi %31, %32 : vector<8x32xi32>
    %34 = arith.sitofp %33 : vector<8x32xi32> to vector<8x32xf32>
    %c3 = arith.constant 3 : index
    %c0_17 = arith.constant 0 : index
    %c0_18 = arith.constant 0 : index
    %35 = vector.load %arg1[%c3, %c0_17, %c0_18] : memref<4x32x128xf32, #tpu.memory_space<vmem>>, vector<1x32x128xf32>
    %36 = vector.shape_cast %35 : vector<1x32x128xf32> to vector<32x128xf32>
    %cst_19 = arith.constant dense<0.000000e+00> : vector<8x128xf32>
    %37 = tpu.matmul %34, %36, %cst_19 {dimension_numbers = #tpu.dot_dimension_numbers<[1], [0], [0], [1], [0, 0, 1, 1], [], []>} : vector<8x32xf32>, vector<32x128xf32>, vector<8x128xf32> -> vector<8x128xf32>
    %38 = arith.addf %29, %37 : vector<8x128xf32>
    %cst_20 = arith.constant 0.000000e+00 : f32
    %39 = vector.broadcast %cst_20 : f32 to vector<8x128xf32>
    %40 = arith.maximumf %0, %39 : vector<8x128xf32>
    %41 = arith.mulf %0, %38 : vector<8x128xf32>
    %42 = arith.subf %40, %41 : vector<8x128xf32>
    %43 = math.absf %0 : vector<8x128xf32>
    %cst_21 = arith.constant 0.000000e+00 : f32
    %44 = vector.broadcast %cst_21 : f32 to vector<8x128xf32>
    %45 = arith.subf %44, %43 : vector<8x128xf32>
    %46 = math.exp %45 : vector<8x128xf32>
    %47 = math.log1p %46 : vector<8x128xf32>
    %48 = arith.addf %42, %47 : vector<8x128xf32>
    %c0_22 = arith.constant 0 : index
    %c0_23 = arith.constant 0 : index
    %49 = vector.load %arg4[%c0_22, %c0_23] : memref<8x128xf32, #tpu.memory_space<vmem>>, vector<8x128xf32>
    tpu.vector_store %arg4[%c0_22, %c0_23], %48 {strides = array<i32>} : memref<8x128xf32, #tpu.memory_space<vmem>>, vector<8x128xf32>,
    return
  }
  func.func @transform_0(%arg0: i32) -> (i32, i32, i32) {
    %c0_i32 = arith.constant 0 : i32
    %c0_i32_0 = arith.constant 0 : i32
    %c0_i32_1 = arith.constant 0 : i32
    %c0_i32_2 = arith.constant 0 : i32
    return %c0_i32, %c0_i32_0, %c0_i32_1 : i32, i32, i32
  }
  func.func @transform_1(%arg0: i32) -> (i32, i32) {
    %c0_i32 = arith.constant 0 : i32
    %c0_i32_0 = arith.constant 0 : i32
    return %arg0, %c0_i32 : i32, i32
  }
  func.func @transform_2(%arg0: i32) -> (i32, i32) {
    %c0_i32 = arith.constant 0 : i32
    %c0_i32_0 = arith.constant 0 : i32
    return %arg0, %c0_i32 : i32, i32
  }
  func.func @transform_3(%arg0: i32) -> (i32, i32) {
    %c0_i32 = arith.constant 0 : i32
    %c0_i32_0 = arith.constant 0 : i32
    return %arg0, %c0_i32 : i32, i32
  }
}

</mosaic_0001>

<llo_original>
// kernel: multi_task_loss.1
$region0: #{multi_task_loss.1}
  #allocation0 [shape = 'u32[]', space=smem, size = 0x4, offset = 0x4, fixed_abs, tag = 'smem constant byte address 0x4 - core index']
  #allocation1 [shape = 'u32[144,128]{1,0:T(1,128)}', space=vmem, size = 0x12000, scoped, tag = 'internal scratch']
  %s0 = inlined_call_operand.vmem [shape: f32[4,32,128], index: 0, kind: input, shape index: {}]
  %s1 = inlined_call_operand.vmem [shape: f32[8,128], index: 1, kind: input, shape index: {}]
  %s2 = inlined_call_operand.vmem [shape: s32[8,32], index: 2, kind: input, shape index: {}]
  %s3 = inlined_call_operand.vmem [shape: f32[8,128], index: 3, kind: output, shape index: {}]
  %s4 = sld [smem:[#allocation0]]
  $region22: #{multi_task_loss.1} parent=0
    _
  %s6 = ssub.s32 1, %s4
  %s7 = scalar_select 0, %s6, %s4
  // Predicated region
  $region2: #{multi_task_loss.1} parent=0 // pred_check
    _
  $region3: #{multi_task_loss.1} parent=0 // pred_check_branch
    %9 = sbr.rel (0) target = $region5
  $region4: #{multi_task_loss.1} parent=0 // pred_region
    _
  $region5: #{multi_task_loss.1} parent=0 // pred_fallthru
    _
  // Predicated region
  $region6: #{multi_task_loss.1} parent=0 // pred_check
    _
  $region7: #{multi_task_loss.1} parent=0 // pred_check_branch
    %11 = sbr.rel (0) target = $region9
  $region8: #{multi_task_loss.1} parent=0 // pred_region
    _
  $region9: #{multi_task_loss.1} parent=0 // pred_fallthru
    _
  // Predicated region
  $region10: #{multi_task_loss.1} parent=0 // pred_check
    _
  $region11: #{multi_task_loss.1} parent=0 // pred_check_branch
    %13 = sbr.rel (0) target = $region13
  $region12: #{multi_task_loss.1} parent=0 // pred_region
    _
  $region13: #{multi_task_loss.1} parent=0 // pred_fallthru
    _
  %v14 = vld [vmem:[%s1] sm:$0xff]
  %v15 = vld [vmem:[%s2] sm:$0xff]
  %v16 = vand.u32 %v15, 1
  %v17 = vcvt.s32.f32 %v16
  %v18 = vld [vmem:[%s0] sm:$0xff]
  %v19 = vld [vmem:[%s0 + $0x8] sm:$0xff]
  %v20 = vld [vmem:[%s0 + $0x10] sm:$0xff]
  %v21 = vld [vmem:[%s0 + $0x18] sm:$0xff]
  %v22 = vshra.s32 %v15, 1
  %v23 = vand.u32 %v22, 1
  %v24 = vcvt.s32.f32 %v23
  %s25 = scalar_lea.vmem %s0, 32
  %v26 = vld [vmem:[%s25] sm:$0xff]
  %v27 = vld [vmem:[%s25 + $0x8] sm:$0xff]
  %v28 = vld [vmem:[%s25 + $0x10] sm:$0xff]
  %v29 = vld [vmem:[%s25 + $0x18] sm:$0xff]
  %vm30 = vcmask 261120
  %v32 = vsel %vm30, %v24, 0
  %34 = vmatprep.subr.mxu0 0.0
  %35 = vmatpush1.msra.mxu0 %v26
  %36 = vmatprep.subr.mxu0 0.0
  %37 = vmatpush1.msra.mxu0 %v27
  %38 = vmatprep.subr.mxu0 0.0
  %39 = vmatpush1.msra.mxu0 %v28
  %40 = vmatprep.subr.mxu0 0.0
  %41 = vmatpush1.msra.mxu0 %v29
  %42 = vmatprep.subr.mxu0 0.0
  %43 = vmatpush1.msra.mxu0 0.0
  %44 = vmatprep.subr.mxu0 0.0
  %45 = vmatpush1.msra.mxu0 0.0
  %46 = vmatprep.subr.mxu0 0.0
  %47 = vmatpush1.msra.mxu0 0.0
  %48 = vmatprep.subr.mxu0 0.0
  %49 = vmatpush1.msra.mxu0 0.0
  %50 = vmatprep.subr.mxu0 0.0
  %51 = vmatpush1.msra.mxu0 0.0
  %52 = vmatprep.subr.mxu0 0.0
  %53 = vmatpush1.msra.mxu0 0.0
  %54 = vmatprep.subr.mxu0 0.0
  %55 = vmatpush1.msra.mxu0 0.0
  %56 = vmatprep.subr.mxu0 0.0
  %57 = vmatpush1.msra.mxu0 0.0
  %58 = vmatprep.subr.mxu0 0.0
  %59 = vmatpush1.msra.mxu0 0.0
  %60 = vmatprep.subr.mxu0 0.0
  %61 = vmatpush1.msra.mxu0 0.0
  %62 = vmatprep.subr.mxu0 0.0
  %63 = vmatpush1.msra.mxu0 0.0
  %64 = vmatprep.subr.mxu0 0.0
  %65 = vmatpush1.msra.mxu0 0.0
  %66 = vmatprep.subr.mxu0 0.0
  %67 = vmatpush1.msra.mxu0 0.0
  %68 = vmatprep.subr.mxu0 0.0
  %69 = vmatpush1.msra.mxu0 0.0
  %70 = vmatprep.subr.mxu0 0.0
  %71 = vmatpush1.msra.mxu0 0.0
  %72 = vmatprep.subr.mxu0 0.0
  %73 = vmatpush1.msra.mxu0 0.0
  %74 = vmatprep.subr.mxu0 0.0
  %75 = vmatpush1.msra.mxu0 0.0
  %76 = vmatprep.subr.mxu0 0.0
  %77 = vmatpush1.msra.mxu0 0.0
  %78 = vmatprep.subr.mxu0 0.0
  %79 = vmatpush1.msra.mxu0 0.0
  %80 = vmatprep.subr.mxu0 0.0
  %81 = vmatpush1.msra.mxu0 0.0
  %82 = vmatprep.subr.mxu0 0.0
  %83 = vmatpush1.msra.mxu0 0.0
  %84 = vmatprep.subr.mxu0 0.0
  %85 = vmatpush1.msra.mxu0 0.0
  %86 = vmatprep.subr.mxu0 0.0
  %87 = vmatpush1.msra.mxu0 0.0
  %88 = vmatprep.subr.mxu0 0.0
  %89 = vmatpush1.msra.mxu0 0.0
  %90 = vmatprep.subr.mxu0 0.0
  %91 = vmatpush1.msra.mxu0 0.0
  %92 = vmatprep.subr.mxu0 0.0
  %93 = vmatpush1.msra.mxu0 0.0
  %94 = vmatprep.subr.mxu0 0.0
  %95 = vmatpush1.msra.mxu0 0.0
  %96 = vmatprep.subr.mxu0 0.0
  %97 = vmatpush1.msra.mxu0 0.0
  %98 = vmatprep.mubr.f32.mxu0 0.0
  %99 = vmatmul.mubr.f32.gmra.mrb[0].mxu0 %v32
  %v100 = vpop.f32.mrb[0].mxu0
  %v101 = vadd.f32 0.0, %v100
  %v102 = vpop.f32.mrb[0].mxu0
  %103 = vdwg.mxu0
  %v105 = vsel %vm30, %v17, 0
  %107 = vmatprep.subr.mxu0 0.0
  %108 = vmatpush1.msra.mxu0 %v18
  %109 = vmatprep.subr.mxu0 0.0
  %110 = vmatpush1.msra.mxu0 %v19
  %111 = vmatprep.subr.mxu0 0.0
  %112 = vmatpush1.msra.mxu0 %v20
  %113 = vmatprep.subr.mxu0 0.0
  %114 = vmatpush1.msra.mxu0 %v21
  %115 = vmatprep.subr.mxu0 0.0
  %116 = vmatpush1.msra.mxu0 0.0
  %117 = vmatprep.subr.mxu0 0.0
  %118 = vmatpush1.msra.mxu0 0.0
  %119 = vmatprep.subr.mxu0 0.0
  %120 = vmatpush1.msra.mxu0 0.0
  %121 = vmatprep.subr.mxu0 0.0
  %122 = vmatpush1.msra.mxu0 0.0
  %123 = vmatprep.subr.mxu0 0.0
  %124 = vmatpush1.msra.mxu0 0.0
  %125 = vmatprep.subr.mxu0 0.0
  %126 = vmatpush1.msra.mxu0 0.0
  %127 = vmatprep.subr.mxu0 0.0
  %128 = vmatpush1.msra.mxu0 0.0
  %129 = vmatprep.subr.mxu0 0.0
  %130 = vmatpush1.msra.mxu0 0.0
  %131 = vmatprep.subr.mxu0 0.0
  %132 = vmatpush1.msra.mxu0 0.0
  %133 = vmatprep.subr.mxu0 0.0
  %134 = vmatpush1.msra.mxu0 0.0
  %135 = vmatprep.subr.mxu0 0.0
  %136 = vmatpush1.msra.mxu0 0.0
  %137 = vmatprep.subr.mxu0 0.0
  %138 = vmatpush1.msra.mxu0 0.0
  %139 = vmatprep.subr.mxu0 0.0
  %140 = vmatpush1.msra.mxu0 0.0
  %141 = vmatprep.subr.mxu0 0.0
  %142 = vmatpush1.msra.mxu0 0.0
  %143 = vmatprep.subr.mxu0 0.0
  %144 = vmatpush1.msra.mxu0 0.0
  %145 = vmatprep.subr.mxu0 0.0
  %146 = vmatpush1.msra.mxu0 0.0
  %147 = vmatprep.subr.mxu0 0.0
  %148 = vmatpush1.msra.mxu0 0.0
  %149 = vmatprep.subr.mxu0 0.0
  %150 = vmatpush1.msra.mxu0 0.0
  %151 = vmatprep.subr.mxu0 0.0
  %152 = vmatpush1.msra.mxu0 0.0
  %153 = vmatprep.subr.mxu0 0.0
  %154 = vmatpush1.msra.mxu0 0.0
  %155 = vmatprep.subr.mxu0 0.0
  %156 = vmatpush1.msra.mxu0 0.0
  %157 = vmatprep.subr.mxu0 0.0
  %158 = vmatpush1.msra.mxu0 0.0
  %159 = vmatprep.subr.mxu0 0.0
  %160 = vmatpush1.msra.mxu0 0.0
  %161 = vmatprep.subr.mxu0 0.0
  %162 = vmatpush1.msra.mxu0 0.0
  %163 = vmatprep.subr.mxu0 0.0
  %164 = vmatpush1.msra.mxu0 0.0
  %165 = vmatprep.subr.mxu0 0.0
  %166 = vmatpush1.msra.mxu0 0.0
  %167 = vmatprep.subr.mxu0 0.0
  %168 = vmatpush1.msra.mxu0 0.0
  %169 = vmatprep.subr.mxu0 0.0
  %170 = vmatpush1.msra.mxu0 0.0
  %171 = vmatprep.mubr.f32.mxu0 0.0
  %172 = vmatmul.mubr.f32.gmra.mrb[0].mxu0 %v105
  %v173 = vpop.f32.mrb[0].mxu0
  %v174 = vadd.f32 %v101, %v173
  %v175 = vpop.f32.mrb[0].mxu0
  %176 = vdwg.mxu0
  %v177 = vshra.s32 %v15, 2
  %v178 = vand.u32 %v177, 1
  %v179 = vcvt.s32.f32 %v178
  %s180 = scalar_lea.vmem %s0, 64
  %v181 = vld [vmem:[%s180] sm:$0xff]
  %v182 = vld [vmem:[%s180 + $0x8] sm:$0xff]
  %v183 = vld [vmem:[%s180 + $0x10] sm:$0xff]
  %v184 = vld [vmem:[%s180 + $0x18] sm:$0xff]
  %v186 = vsel %vm30, %v179, 0
  %188 = vmatprep.subr.mxu0 0.0
  %189 = vmatpush1.msra.mxu0 %v181
  %190 = vmatprep.subr.mxu0 0.0
  %191 = vmatpush1.msra.mxu0 %v182
  %192 = vmatprep.subr.mxu0 0.0
  %193 = vmatpush1.msra.mxu0 %v183
  %194 = vmatprep.subr.mxu0 0.0
  %195 = vmatpush1.msra.mxu0 %v184
  %196 = vmatprep.subr.mxu0 0.0
  %197 = vmatpush1.msra.mxu0 0.0
  %198 = vmatprep.subr.mxu0 0.0
  %199 = vmatpush1.msra.mxu0 0.0
  %200 = vmatprep.subr.mxu0 0.0
  %201 = vmatpush1.msra.mxu0 0.0
  %202 = vmatprep.subr.mxu0 0.0
  %203 = vmatpush1.msra.mxu0 0.0
  %204 = vmatprep.subr.mxu0 0.0
  %205 = vmatpush1.msra.mxu0 0.0
  %206 = vmatprep.subr.mxu0 0.0
  %207 = vmatpush1.msra.mxu0 0.0
  %208 = vmatprep.subr.mxu0 0.0
  %209 = vmatpush1.msra.mxu0 0.0
  %210 = vmatprep.subr.mxu0 0.0
  %211 = vmatpush1.msra.mxu0 0.0
  %212 = vmatprep.subr.mxu0 0.0
  %213 = vmatpush1.msra.mxu0 0.0
  %214 = vmatprep.subr.mxu0 0.0
  %215 = vmatpush1.msra.mxu0 0.0
  %216 = vmatprep.subr.mxu0 0.0
  %217 = vmatpush1.msra.mxu0 0.0
  %218 = vmatprep.subr.mxu0 0.0
  %219 = vmatpush1.msra.mxu0 0.0
  %220 = vmatprep.subr.mxu0 0.0
  %221 = vmatpush1.msra.mxu0 0.0
  %222 = vmatprep.subr.mxu0 0.0
  %223 = vmatpush1.msra.mxu0 0.0
  %224 = vmatprep.subr.mxu0 0.0
  %225 = vmatpush1.msra.mxu0 0.0
  %226 = vmatprep.subr.mxu0 0.0
  %227 = vmatpush1.msra.mxu0 0.0
  %228 = vmatprep.subr.mxu0 0.0
  %229 = vmatpush1.msra.mxu0 0.0
  %230 = vmatprep.subr.mxu0 0.0
  %231 = vmatpush1.msra.mxu0 0.0
  %232 = vmatprep.subr.mxu0 0.0
  %233 = vmatpush1.msra.mxu0 0.0
  %234 = vmatprep.subr.mxu0 0.0
  %235 = vmatpush1.msra.mxu0 0.0
  %236 = vmatprep.subr.mxu0 0.0
  %237 = vmatpush1.msra.mxu0 0.0
  %238 = vmatprep.subr.mxu0 0.0
  %239 = vmatpush1.msra.mxu0 0.0
  %240 = vmatprep.subr.mxu0 0.0
  %241 = vmatpush1.msra.mxu0 0.0
  %242 = vmatprep.subr.mxu0 0.0
  %243 = vmatpush1.msra.mxu0 0.0
  %244 = vmatprep.subr.mxu0 0.0
  %245 = vmatpush1.msra.mxu0 0.0
  %246 = vmatprep.subr.mxu0 0.0
  %247 = vmatpush1.msra.mxu0 0.0
  %248 = vmatprep.subr.mxu0 0.0
  %249 = vmatpush1.msra.mxu0 0.0
  %250 = vmatprep.subr.mxu0 0.0
  %251 = vmatpush1.msra.mxu0 0.0
  %252 = vmatprep.mubr.f32.mxu0 0.0
  %253 = vmatmul.mubr.f32.gmra.mrb[0].mxu0 %v186
  %v254 = vpop.f32.mrb[0].mxu0
  %v255 = vadd.f32 0.0, %v254
  %v256 = vpop.f32.mrb[0].mxu0
  %257 = vdwg.mxu0
  %v258 = vadd.f32 %v174, %v255
  %v259 = vshra.s32 %v15, 3
  %v260 = vand.u32 %v259, 1
  %v261 = vcvt.s32.f32 %v260
  %s262 = scalar_lea.vmem %s0, 96
  %v263 = vld [vmem:[%s262] sm:$0xff]
  %v264 = vld [vmem:[%s262 + $0x8] sm:$0xff]
  %v265 = vld [vmem:[%s262 + $0x10] sm:$0xff]
  %v266 = vld [vmem:[%s262 + $0x18] sm:$0xff]
  %v268 = vsel %vm30, %v261, 0
  %270 = vmatprep.subr.mxu0 0.0
  %271 = vmatpush1.msra.mxu0 %v263
  %272 = vmatprep.subr.mxu0 0.0
  %273 = vmatpush1.msra.mxu0 %v264
  %274 = vmatprep.subr.mxu0 0.0
  %275 = vmatpush1.msra.mxu0 %v265
  %276 = vmatprep.subr.mxu0 0.0
  %277 = vmatpush1.msra.mxu0 %v266
  %278 = vmatprep.subr.mxu0 0.0
  %279 = vmatpush1.msra.mxu0 0.0
  %280 = vmatprep.subr.mxu0 0.0
  %281 = vmatpush1.msra.mxu0 0.0
  %282 = vmatprep.subr.mxu0 0.0
  %283 = vmatpush1.msra.mxu0 0.0
  %284 = vmatprep.subr.mxu0 0.0
  %285 = vmatpush1.msra.mxu0 0.0
  %286 = vmatprep.subr.mxu0 0.0
  %287 = vmatpush1.msra.mxu0 0.0
  %288 = vmatprep.subr.mxu0 0.0
  %289 = vmatpush1.msra.mxu0 0.0
  %290 = vmatprep.subr.mxu0 0.0
  %291 = vmatpush1.msra.mxu0 0.0
  %292 = vmatprep.subr.mxu0 0.0
  %293 = vmatpush1.msra.mxu0 0.0
  %294 = vmatprep.subr.mxu0 0.0
  %295 = vmatpush1.msra.mxu0 0.0
  %296 = vmatprep.subr.mxu0 0.0
  %297 = vmatpush1.msra.mxu0 0.0
  %298 = vmatprep.subr.mxu0 0.0
  %299 = vmatpush1.msra.mxu0 0.0
  %300 = vmatprep.subr.mxu0 0.0
  %301 = vmatpush1.msra.mxu0 0.0
  %302 = vmatprep.subr.mxu0 0.0
  %303 = vmatpush1.msra.mxu0 0.0
  %304 = vmatprep.subr.mxu0 0.0
  %305 = vmatpush1.msra.mxu0 0.0
  %306 = vmatprep.subr.mxu0 0.0
  %307 = vmatpush1.msra.mxu0 0.0
  %308 = vmatprep.subr.mxu0 0.0
  %309 = vmatpush1.msra.mxu0 0.0
  %310 = vmatprep.subr.mxu0 0.0
  %311 = vmatpush1.msra.mxu0 0.0
  %312 = vmatprep.subr.mxu0 0.0
  %313 = vmatpush1.msra.mxu0 0.0
  %314 = vmatprep.subr.mxu0 0.0
  %315 = vmatpush1.msra.mxu0 0.0
  %316 = vmatprep.subr.mxu0 0.0
  %317 = vmatpush1.msra.mxu0 0.0
  %318 = vmatprep.subr.mxu0 0.0
  %319 = vmatpush1.msra.mxu0 0.0
  %320 = vmatprep.subr.mxu0 0.0
  %321 = vmatpush1.msra.mxu0 0.0
  %322 = vmatprep.subr.mxu0 0.0
  %323 = vmatpush1.msra.mxu0 0.0
  %324 = vmatprep.subr.mxu0 0.0
  %325 = vmatpush1.msra.mxu0 0.0
  %326 = vmatprep.subr.mxu0 0.0
  %327 = vmatpush1.msra.mxu0 0.0
  %328 = vmatprep.subr.mxu0 0.0
  %329 = vmatpush1.msra.mxu0 0.0
  %330 = vmatprep.subr.mxu0 0.0
  %331 = vmatpush1.msra.mxu0 0.0
  %332 = vmatprep.subr.mxu0 0.0
  %333 = vmatpush1.msra.mxu0 0.0
  %334 = vmatprep.mubr.f32.mxu0 0.0
  %335 = vmatmul.mubr.f32.gmra.mrb[0].mxu0 %v268
  %v336 = vpop.f32.mrb[0].mxu0
  %v337 = vadd.f32 0.0, %v336
  %v338 = vpop.f32.mrb[0].mxu0
  %339 = vdwg.mxu0
  %v340 = vadd.f32 %v258, %v337
  %v341 = vmax.f32 %v14, 0.0
  %v342 = vmul.f32 %v14, %v340
  %v343 = vsub.f32 %v341, %v342
  %v344 = vand.u32 2147483647, %v14
  %v345 = vsub.f32 0.0, %v344
  %v346 = vmul.f32 %v345, 1.442695
  %v347 = vpow.pop %v346
  %v348 = vadd.f32 %v347, 1.0
  %v349 = vlog2.pop %v348
  %v350 = vmul.f32 %v349, 0.6931472
  %v351 = vmul.f32 -0.5, %v347
  %v352 = vadd.f32 %v351, 1.0
  %v353 = vmul.f32 %v352, %v347
  %v354 = vand.u32 2147483647, %v347
  %vm355 = vcmp.lt.f32.partialorder %v354, 0.0004427343
  %v356 = vsel %vm355, %v353, %v350
  %v357 = vadd.f32 %v343, %v356
  %358 = vst [vmem:[%s3] sm:$0xff] %v357
  // Predicated region
  $region14: #{multi_task_loss.1} parent=0 // pred_check
    _
  $region15: #{multi_task_loss.1} parent=0 // pred_check_branch
    %360 = sbr.rel (0) target = $region17
  $region16: #{multi_task_loss.1} parent=0 // pred_region
    _
  $region17: #{multi_task_loss.1} parent=0 // pred_fallthru
    _
  // Predicated region
  $region18: #{multi_task_loss.1} parent=0 // pred_check
    _
  $region19: #{multi_task_loss.1} parent=0 // pred_check_branch
    %362 = sbr.rel (0) target = $region21
  $region20: #{multi_task_loss.1} parent=0 // pred_region
    _
  $region21: #{multi_task_loss.1} parent=0 // pred_fallthru
    _

</llo_original>
